<compile_context>
chip_gen: v5e
topology: v5e:2x2
jax: 0.10.0
libtpu: 0.0.40
codegen_flags: <defaults>
</compile_context>

<pallas_src>
import functools

import jax
import jax.numpy as jnp
from jax.experimental import pallas as pl
from jax.experimental.pallas import tpu as pltpu


ENCODER_D = 128              # encoder_d default in the PyTorch module
LN_EPS = 1e-6
_MIN_ROWS_FOR_PALLAS = 1024  # below this a single XLA fusion beats the launch
_MAX_TM = 8192               # upper bound on the row tile (multiple of 8)


# --------------------------------------------------------------------------
# Kernel
# --------------------------------------------------------------------------
def _encoder_kernel(x_ref, p_ref, out_ref):
    """LayerNorm(x @ W) for one (tm, D) row tile.

    x_ref:   (tm, 2) f32  -- flattened point coordinates
    p_ref:   (4, D)  f32  -- rows 0..1: point_emb weight (W^T),
                             row 2: LayerNorm gamma, row 3: LayerNorm beta
    out_ref: (tm, D)      -- f32 or bf16 (cast only at the store)
    """
    x = x_ref[...]
    p = p_ref[...]

    # Point embedding: K=2 contraction as two exact-f32 broadcast FMAs.
    # (MXU dot is equivalent but neutral here — kernel is HBM-write bound.)
    emb = x[:, 0:1] * p[0:1, :] + x[:, 1:2] * p[1:2, :]          # (tm, D) f32

    # LayerNorm over features (biased variance, eps inside rsqrt: torch LN).
    mean = jnp.mean(emb, axis=-1, keepdims=True)                 # (tm, 1)
    cent = emb - mean
    var = jnp.mean(cent * cent, axis=-1, keepdims=True)          # (tm, 1)
    norm = cent * jax.lax.rsqrt(var + LN_EPS)

    out_ref[...] = (norm * p[2:3, :] + p[3:4, :]).astype(out_ref.dtype)


def _choose_tm(m, max_tm=_MAX_TM):
    """Row tile: big enough to amortize the ~0.35us per-step overhead, but
    guaranteeing >= 4 grid steps (>= 2 per v7x TensorCore).  Multiple of 8."""
    tm = max(8, min(max_tm, m // 4))
    return max(8, (tm // 8) * 8)


@functools.partial(jax.jit, static_argnames=("tm", "out_dtype"))
def _encoder_pallas_call(v_flat, fused, *, tm, out_dtype):
    m, _ = v_flat.shape
    d = fused.shape[1]
    grid = pl.cdiv(m, tm)                 # ragged tail handled by Pallas masking
    out_itemsize = jnp.dtype(out_dtype).itemsize

    # VMEM budget: under (8,128) f32 tiling the (tm, 2) input block occupies
    # tm*128*4 B — same footprint as an f32 (tm, 128) output tile.  Everything
    # is double-buffered by the pipeline.
    lanes_d = ((d + 127) // 128) * 128
    per_step = (tm * 128 * 4) + (tm * d * out_itemsize) + (8 * lanes_d * 4)
    vmem_needed = 2 * per_step            # double buffering
    vmem_limit = int(min(max(2 * vmem_needed, 32 * 1024 * 1024),
                         48 * 1024 * 1024))

    cost = pl.CostEstimate(
        flops=2 * m * 2 * d + 8 * m * d,            # FMAs + LN arithmetic
        transcendentals=m,                          # one rsqrt per row
        bytes_accessed=m * 2 * 4 + 4 * d * 4 + m * d * out_itemsize,
    )

    return pl.pallas_call(
        _encoder_kernel,
        out_shape=jax.ShapeDtypeStruct((m, d), out_dtype),
        grid_spec=pltpu.PrefetchScalarGridSpec(
            num_scalar_prefetch=0,
            grid=(grid,),
            in_specs=[
                pl.BlockSpec((tm, 2), lambda i: (i, 0)),   # x row-tile
                pl.BlockSpec((4, d), lambda i: (0, 0)),    # fused W/gamma/beta
            ],
            out_specs=pl.BlockSpec((tm, d), lambda i: (i, 0)),
        ),
        compiler_params=pltpu.CompilerParams(
            dimension_semantics=("parallel",),
            vmem_limit_bytes=vmem_limit,
        ),
        cost_estimate=cost,
    )(v_flat, fused)


def encoder_pallas(v_flat, fused, *, max_tm=_MAX_TM, out_dtype=jnp.float32):
    """v_flat: (M, 2) -> (M, D).  Any M; ragged tail masked inside Pallas."""
    m = v_flat.shape[0]
    tm = _choose_tm(m, max_tm)
    return _encoder_pallas_call(v_flat.astype(jnp.float32), fused,
                                tm=tm, out_dtype=out_dtype)


# --------------------------------------------------------------------------
# Parameters / reference
# --------------------------------------------------------------------------
def build_fused_encoder_params(w_emb, gamma, beta):
    """Stack Linear weight (W^T, (2,D)), LN gamma, LN beta into one (4, D)
    resident block.  Accepts (D,) or (1, D) gamma/beta."""
    w_emb = jnp.asarray(w_emb, jnp.float32).reshape(2, -1)
    d = w_emb.shape[1]
    gamma = jnp.asarray(gamma, jnp.float32).reshape(1, d)
    beta = jnp.asarray(beta, jnp.float32).reshape(1, d)
    return jnp.concatenate([w_emb, gamma, beta], axis=0)


def _encoder_ref(v_flat, fused):
    """Pure-JAX reference (also the small-M fast path).  Exact f32 math."""
    v = v_flat.astype(jnp.float32)
    emb = v[:, 0:1] * fused[0:1, :] + v[:, 1:2] * fused[1:2, :]
    mu = emb.mean(-1, keepdims=True)
    var = ((emb - mu) ** 2).mean(-1, keepdims=True)
    return (emb - mu) * jax.lax.rsqrt(var + LN_EPS) * fused[2:3, :] + fused[3:4, :]


def init_actor_params(key, encoder_d=ENCODER_D):
    """Deterministic synthetic parameters (shapes from Actor.__init__)."""
    (k_emb,) = jax.random.split(key, 1)
    # nn.Linear(2, encoder_d, bias=False): torch weight is (encoder_d, 2);
    # stored transposed as (2, encoder_d).
    w_emb = jax.random.normal(k_emb, (2, encoder_d), dtype=jnp.float32) * 0.1
    gamma = jnp.ones((encoder_d,), dtype=jnp.float32)   # LayerNorm default init
    beta = jnp.zeros((encoder_d,), dtype=jnp.float32)
    return {
        "w_emb": w_emb,
        "ln_gamma": gamma,
        "ln_beta": beta,
        # Fused kernel operand built once at init time (not per call).
        "fused": build_fused_encoder_params(w_emb, gamma, beta),
    }


# --------------------------------------------------------------------------
# Actor forward
# --------------------------------------------------------------------------
def actor_forward(V, params, *, min_rows_for_pallas=_MIN_ROWS_FOR_PALLAS,
                  out_dtype=jnp.float32):
    """Mirrors Actor.forward(V) as far as the provided source allows.

    V: (B, N, 2) float.  Returns (xes, p, encoder_outputs).
    """
    B, N, _ = V.shape

    # mask = ones(1).repeat(N).unsqueeze(0).repeat(B, 1).long()
    mask = jnp.ones((B, N), dtype=jnp.int32)

    # Encoder: reshape(-1, 2) -> point_emb -> reshape -> layer_norm
    v_flat = V.reshape(-1, 2).astype(jnp.float32)
    fused = params["fused"]
    if v_flat.shape[0] >= min_rows_for_pallas:
        enc_flat = encoder_pallas(v_flat, fused, out_dtype=out_dtype)
    else:
        # Toy sizes: a single XLA fusion beats the pallas_call launch.
        enc_flat = _encoder_ref(v_flat, fused).astype(out_dtype)
    d = fused.shape[1]
    encoder_outputs = enc_flat.reshape(B, N, d)
    # TODO(synk): EncoderLayer / PTM / EPTM definitions are missing from the
    #             reference source; layer_stack is treated as identity and the
    #             (num_p - 1)-step autoregressive pointer loop is skipped.

    # p = ones(B, 1); xes = zeros(1).repeat(B*3).reshape(B, 3).unsqueeze(1)
    p = jnp.ones((B, 1), dtype=jnp.float32)
    xes = jnp.zeros((B, 1, 3), dtype=jnp.int32)

    del mask
    return xes, p, encoder_outputs


# --------------------------------------------------------------------------
# Self-test
# --------------------------------------------------------------------------
if __name__ == "__main__":
    key = jax.random.PRNGKey(0)
    k_v, k_v2, k_p = jax.random.split(key, 3)

    params = init_actor_params(k_p)

    # 1) Full forward at small shapes (M = 26 < 1024 -> pure-JAX encoder path).
    B, N = 2, 13
    V = jax.random.uniform(k_v, (B, N, 2), dtype=jnp.float32)
    xes, p, enc = actor_forward(V, params)
    jax.block_until_ready((xes, p, enc))
    ref_small = _encoder_ref(V.reshape(-1, 2), params["fused"])
    assert xes.shape == (B, 1, 3) and p.shape == (B, 1)
    assert enc.shape == (B, N, ENCODER_D)
    assert jnp.allclose(enc.reshape(-1, ENCODER_D), ref_small,
                        atol=1e-4, rtol=1e-4)

    # 2) Pallas kernel directly on the tiny input: 26 rows, tm=8, grid=4 with a
    #    ragged last tile (exercises the in-kernel masked tail, no pad/slice).
    out_tiny = encoder_pallas(V.reshape(-1, 2), params["fused"])
    jax.block_until_ready(out_tiny)
    assert out_tiny.shape == (B * N, ENCODER_D)
    assert jnp.allclose(out_tiny, ref_small, atol=1e-4, rtol=1e-4)

    # 3) Medium, non-divisible row count through the full forward (kernel path:
    #    M = 1284, tm = 320, grid = 5, last tile has 4 valid rows).
    B2, N2 = 4, 321
    V2 = jax.random.uniform(k_v2, (B2, N2, 2), dtype=jnp.float32)
    xes2, p2, enc2 = actor_forward(V2, params)
    jax.block_until_ready(enc2)
    ref_med = _encoder_ref(V2.reshape(-1, 2), params["fused"])
    assert jnp.allclose(enc2.reshape(-1, ENCODER_D), ref_med,
                        atol=1e-4, rtol=1e-4)

    # 4) bf16-output variant (halves the dominant HBM write); relaxed tolerance
    #    because only the final store is cast.
    out_bf16 = encoder_pallas(V2.reshape(-1, 2), params["fused"],
                              out_dtype=jnp.bfloat16)
    jax.block_until_ready(out_bf16)
    assert out_bf16.dtype == jnp.bfloat16
    assert jnp.allclose(out_bf16.astype(jnp.float32), ref_med,
                        atol=3e-2, rtol=3e-2)

    print("KERNEL_OK")
</pallas_src>

<mosaic_0001>
module attributes {stable_mosaic.version = 11 : i64} {
  func.func @_encoder_kernel(%arg0: i32, %arg1: memref<8x2xf32, #tpu.memory_space<vmem>>, %arg2: memref<4x128xf32, #tpu.memory_space<vmem>>, %arg3: memref<8x128xf32, #tpu.memory_space<vmem>>) attributes {dimension_semantics = [#tpu.dimension_semantics<parallel>], iteration_bounds = array<i64: 4>, scalar_prefetch = 0 : i64, scratch_operands = 0 : i64, tpu.core_type = #tpu.core_type<tc>, window_params = [{transform_indices = @transform_0, window_bounds = array<i64: 8, 2>}, {pipeline_mode = #tpu.pipeline_mode<synchronous>, transform_indices = @transform_1, window_bounds = array<i64: 4, 128>}, {transform_indices = @transform_2, window_bounds = array<i64: 8, 128>}]} {
    %c0 = arith.constant 0 : index
    %c0_0 = arith.constant 0 : index
    %0 = vector.load %arg1[%c0, %c0_0] : memref<8x2xf32, #tpu.memory_space<vmem>>, vector<8x2xf32>
    %c0_1 = arith.constant 0 : index
    %c0_2 = arith.constant 0 : index
    %1 = vector.load %arg2[%c0_1, %c0_2] : memref<4x128xf32, #tpu.memory_space<vmem>>, vector<4x128xf32>
    %2 = vector.extract_strided_slice %0 {offsets = [0, 0], sizes = [8, 1], strides = [1, 1]} : vector<8x2xf32> to vector<8x1xf32>
    %3 = vector.extract_strided_slice %1 {offsets = [0, 0], sizes = [1, 128], strides = [1, 1]} : vector<4x128xf32> to vector<1x128xf32>
    %4 = vector.broadcast %2 : vector<8x1xf32> to vector<8x128xf32>
    %5 = vector.broadcast %3 : vector<1x128xf32> to vector<8x128xf32>
    %6 = arith.mulf %4, %5 : vector<8x128xf32>
    %7 = vector.extract_strided_slice %0 {offsets = [0, 1], sizes = [8, 1], strides = [1, 1]} : vector<8x2xf32> to vector<8x1xf32>
    %8 = vector.extract_strided_slice %1 {offsets = [1, 0], sizes = [1, 128], strides = [1, 1]} : vector<4x128xf32> to vector<1x128xf32>
    %9 = vector.broadcast %7 : vector<8x1xf32> to vector<8x128xf32>
    %10 = vector.broadcast %8 : vector<1x128xf32> to vector<8x128xf32>
    %11 = arith.mulf %9, %10 : vector<8x128xf32>
    %12 = arith.addf %6, %11 : vector<8x128xf32>
    %cst = arith.constant dense<0.000000e+00> : vector<8xf32>
    %13 = vector.multi_reduction <add>, %12, %cst [1] : vector<8x128xf32> to vector<8xf32>
    %14 = vector.shape_cast %13 : vector<8xf32> to vector<8x1xf32>
    %cst_3 = arith.constant 1.280000e+02 : f32
    %15 = vector.broadcast %cst_3 : f32 to vector<8x1xf32>
    %16 = arith.divf %14, %15 : vector<8x1xf32>
    %17 = vector.broadcast %16 : vector<8x1xf32> to vector<8x128xf32>
    %18 = arith.subf %12, %17 : vector<8x128xf32>
    %19 = arith.mulf %18, %18 : vector<8x128xf32>
    %cst_4 = arith.constant dense<0.000000e+00> : vector<8xf32>
    %20 = vector.multi_reduction <add>, %19, %cst_4 [1] : vector<8x128xf32> to vector<8xf32>
    %21 = vector.shape_cast %20 : vector<8xf32> to vector<8x1xf32>
    %cst_5 = arith.constant 1.280000e+02 : f32
    %22 = vector.broadcast %cst_5 : f32 to vector<8x1xf32>
    %23 = arith.divf %21, %22 : vector<8x1xf32>
    %cst_6 = arith.constant 9.99999997E-7 : f32
    %24 = vector.broadcast %cst_6 : f32 to vector<8x1xf32>
    %25 = arith.addf %23, %24 : vector<8x1xf32>
    %26 = math.rsqrt %25 : vector<8x1xf32>
    %27 = vector.broadcast %26 : vector<8x1xf32> to vector<8x128xf32>
    %28 = arith.mulf %18, %27 : vector<8x128xf32>
    %29 = vector.extract_strided_slice %1 {offsets = [2, 0], sizes = [1, 128], strides = [1, 1]} : vector<4x128xf32> to vector<1x128xf32>
    %30 = vector.broadcast %29 : vector<1x128xf32> to vector<8x128xf32>
    %31 = arith.mulf %28, %30 : vector<8x128xf32>
    %32 = vector.extract_strided_slice %1 {offsets = [3, 0], sizes = [1, 128], strides = [1, 1]} : vector<4x128xf32> to vector<1x128xf32>
    %33 = vector.broadcast %32 : vector<1x128xf32> to vector<8x128xf32>
    %34 = arith.addf %31, %33 : vector<8x128xf32>
    %c0_7 = arith.constant 0 : index
    %c0_8 = arith.constant 0 : index
    %35 = vector.load %arg3[%c0_7, %c0_8] : memref<8x128xf32, #tpu.memory_space<vmem>>, vector<8x128xf32>
    tpu.vector_store %arg3[%c0_7, %c0_8], %34 {strides = array<i32>} : memref<8x128xf32, #tpu.memory_space<vmem>>, vector<8x128xf32>,
    return
  }
  func.func @transform_0(%arg0: i32) -> (i32, i32) {
    %c0_i32 = arith.constant 0 : i32
    %c0_i32_0 = arith.constant 0 : i32
    return %arg0, %c0_i32 : i32, i32
  }
  func.func @transform_1(%arg0: i32) -> (i32, i32) {
    %c0_i32 = arith.constant 0 : i32
    %c0_i32_0 = arith.constant 0 : i32
    %c0_i32_1 = arith.constant 0 : i32
    return %c0_i32, %c0_i32_0 : i32, i32
  }
  func.func @transform_2(%arg0: i32) -> (i32, i32) {
    %c0_i32 = arith.constant 0 : i32
    %c0_i32_0 = arith.constant 0 : i32
    return %arg0, %c0_i32 : i32, i32
  }
}

</mosaic_0001>

<llo_original>
// kernel: _encoder_pallas_call.1
$region0: #{_encoder_pallas_call.1}
  #allocation0 [shape = 'u32[]', space=smem, size = 0x4, offset = 0x4, fixed_abs, tag = 'smem constant byte address 0x4 - core index']
  #allocation1 [shape = 'u32[72,128]{1,0:T(1,128)}', space=vmem, size = 0x9000, scoped, tag = 'internal scratch']
  %s0 = inlined_call_operand.vmem [shape: f32[26,2], index: 0, kind: input, shape index: {}]
  %s1 = inlined_call_operand.vmem [shape: f32[4,128], index: 1, kind: input, shape index: {}]
  %s2 = inlined_call_operand.hbm [shape: f32[26,128], index: 2, kind: output, shape index: {}]
  %s3 = sld [smem:[#allocation0]]
  $region41: #{_encoder_pallas_call.1} parent=0
    _
  %s5 = ssub.s32 1, %s3
  %s6 = scalar_select 0, %s5, %s3
  $region1: #{_encoder_pallas_call.1} parent=0
    #allocation2 [shape = 'u8[8192]{0}', space=vmem, size = 0x2000, scoped, tag = 'output window, operand 0']
    #allocation3 [shape = 's32[2]{0}', space=sflag, size = 0x8, scoped, tag = 'scoped memory for _encoder_pallas_call.1']
    %7 = vsyncpa [#allocation3], 0
    %s8 = scalar_lea.sflag [#allocation3], 1
    %9 = vsyncpa %s8, 0
    loop: start=0, step=1, limit=6
    $region2: #{_encoder_pallas_call.1} parent=1 // loop_pre_header
      _
    $region3: #{_encoder_pallas_call.1} parent=1 // loop_header
      %s11 = sphi 0, %s15
      %p12 = scmp.ge.s32.totalorder %s11, 6
      %s21 = sphi 0, %s23
      %s24 = sphi 0, %s21
      %s25 = sphi 0, %s24
      %s41 = sphi 0, %s25
      %s45 = sphi 0, %s45
      %s47 = sphi 0, %s45
      %s48 = sphi 0, %s47
      %s62 = sphi 0, %s48
      %s68 = sphi 0, %s70
      %s71 = sphi 0, %s68
      %s72 = sphi 0, %s71
      %s88 = sphi 0, %s72
    $region4: #{_encoder_pallas_call.1} parent=1 // loop_header_branch
      %14 = sbr.rel (%p12) target = $region8
    $region5: #{_encoder_pallas_call.1} parent=1 // loop_body
      %s16 = ssub.s32 %s11, 1
      %s17 = ssub.s32 %s11, 2
      %s18 = sadd.s32 %s11, 1
      %s19 = ssub.s32 %s11, %s18
      %p20 = scmp.eq.s32.totalorder %s19, 0
      %s22 = sadd.s32 %s21, 1
      %s23 = scalar_select %p20, %s21, %s22
      %p26 = pneg %p20
      %p27 = scmp.eq.s32.totalorder %s11, 3
      %p28 = por %p26, %p27
      %p29 = scmp.ne.s32.totalorder %s21, %s24
      %p30 = scmp.eq.s32.totalorder %s11, 0
      %p31 = por %p29, %p30
      %p32 = scmp.ne.s32.totalorder %s21, %s24
      %p33 = scmp.eq.s32.totalorder %s16, 3
      %p34 = por %p32, %p33
      %p35 = scmp.ne.s32.totalorder %s24, %s25
      %p36 = scmp.eq.s32.totalorder %s16, 0
      %p37 = por %p35, %p36
      %p38 = scmp.ne.s32.totalorder %s24, %s25
      %p39 = scmp.eq.s32.totalorder %s17, 3
      %p40 = por %p38, %p39
      %p42 = scmp.ne.s32.totalorder %s25, %s41
      %p43 = scmp.eq.s32.totalorder %s17, 0
      %p44 = por %p42, %p43
      %s46 = sadd.s32 %s45, 1
      %p49 = scmp.eq.s32.totalorder %s11, 3
      %p50 = scmp.ne.s32.totalorder %s45, %s47
      %p51 = scmp.eq.s32.totalorder %s11, 0
      %p52 = por %p50, %p51
      %p53 = scmp.ne.s32.totalorder %s45, %s47
      %p54 = scmp.eq.s32.totalorder %s16, 3
      %p55 = por %p53, %p54
      %p56 = scmp.ne.s32.totalorder %s47, %s48
      %p57 = scmp.eq.s32.totalorder %s16, 0
      %p58 = por %p56, %p57
      %p59 = scmp.ne.s32.totalorder %s47, %s48
      %p60 = scmp.eq.s32.totalorder %s17, 3
      %p61 = por %p59, %p60
      %p63 = scmp.ne.s32.totalorder %s48, %s62
      %p64 = scmp.eq.s32.totalorder %s17, 0
      %p65 = por %p63, %p64
      %s66 = ssub.s32 %s11, %s18
      %p67 = scmp.eq.s32.totalorder %s66, 0
      %s69 = sadd.s32 %s68, 1
      %s70 = scalar_select %p67, %s68, %s69
      %p73 = pneg %p67
      %p74 = scmp.eq.s32.totalorder %s11, 3
      %p75 = por %p73, %p74
      %p76 = scmp.ne.s32.totalorder %s68, %s71
      %p77 = scmp.eq.s32.totalorder %s11, 0
      %p78 = por %p76, %p77
      %p79 = scmp.ne.s32.totalorder %s68, %s71
      %p80 = scmp.eq.s32.totalorder %s16, 3
      %p81 = por %p79, %p80
      %p82 = scmp.ne.s32.totalorder %s71, %s72
      %p83 = scmp.eq.s32.totalorder %s16, 0
      %p84 = por %p82, %p83
      %p85 = scmp.ne.s32.totalorder %s71, %s72
      %p86 = scmp.eq.s32.totalorder %s17, 3
      %p87 = por %p85, %p86
      %p89 = scmp.ne.s32.totalorder %s72, %s88
      %p90 = scmp.eq.s32.totalorder %s17, 0
      %p91 = por %p89, %p90
      %p92 = scmp.le.s32.totalorder 1, %s11
      %p93 = scmp.lt.s32.totalorder %s11, 5
      %p94 = pnand %p92, %p93
      %p95 = pneg %p94
      // Predicated region
      $region9: #{_encoder_pallas_call.1} parent=5 // pred_check
        _
      $region10: #{_encoder_pallas_call.1} parent=5 // pred_check_branch
        %97 = sbr.rel (%p94) target = $region12
      $region11: #{_encoder_pallas_call.1} parent=5 // pred_region
        %s98 = ssub.s32 %s11, 1
        // Predicated region
        $region13: #{_encoder_pallas_call.1} parent=11 // pred_check
          %p99 = pneg %p58
        $region14: #{_encoder_pallas_call.1} parent=11 // pred_check_branch
          %101 = sbr.rel (%p99) target = $region16
        $region15: #{_encoder_pallas_call.1} parent=11 // pred_region
          _
        $region16: #{_encoder_pallas_call.1} parent=11 // pred_fallthru
          _
      $region12: #{_encoder_pallas_call.1} parent=5 // pred_fallthru
        _
      %p102 = scmp.lt.s32.totalorder %s11, 4
      // Predicated region
      $region17: #{_encoder_pallas_call.1} parent=5 // pred_check
        %p103 = pneg %p102
      $region18: #{_encoder_pallas_call.1} parent=5 // pred_check_branch
        %105 = sbr.rel (%p103) target = $region20
      $region19: #{_encoder_pallas_call.1} parent=5 // pred_region
        // Predicated region
        $region21: #{_encoder_pallas_call.1} parent=19 // pred_check
          %p106 = pneg %p31
        $region22: #{_encoder_pallas_call.1} parent=19 // pred_check_branch
          %108 = sbr.rel (%p106) target = $region24
        $region23: #{_encoder_pallas_call.1} parent=19 // pred_region
          %p109 = scmp.lt.s32.totalorder %s11, 3
          %s110 = scalar_select %p109, %s11, 3
          %s111 = smul.addr %s110, 8
          %s112 = scalar_lea.vmem %s0, %s111
        $region24: #{_encoder_pallas_call.1} parent=19 // pred_fallthru
          _
      $region20: #{_encoder_pallas_call.1} parent=5 // pred_fallthru
        _
      %p113 = scmp.le.s32.totalorder 1, %s11
      %p114 = scmp.lt.s32.totalorder %s11, 5
      %p115 = pnand %p113, %p114
      %p116 = pneg %p115
      // Predicated region
      $region25: #{_encoder_pallas_call.1} parent=5 // pred_check
        _
      $region26: #{_encoder_pallas_call.1} parent=5 // pred_check_branch
        %118 = sbr.rel (%p115) target = $region28
      $region27: #{_encoder_pallas_call.1} parent=5 // pred_region
        %s119 = ssub.s32 %s11, 1
        %p120 = scmp.lt.s32.totalorder %s16, 3
        %s121 = scalar_select %p120, %s16, 3
        %s122 = smul.addr %s121, 8
        %s123 = scalar_lea.vmem %s0, %s122
        %p124 = pneg %p37
        %p125 = pneg %p34
        %p126 = pneg %p58
        %p127 = pneg %p55
        %p128 = pneg %p84
        %p129 = pneg %p81
        %s130 = sand.u32 %s71, 1
        %s131 = scalar_lea.sflag [#allocation3], %s130
        %s132 = sand.u32 %s71, 1
        %s133 = smul.addr %s132, 8
        %s134 = scalar_lea.vmem [#allocation2], %s133
        %p135 = scmp.lt.s32.totalorder %s16, 3
        %s136 = scalar_select %p135, %s16, 3
        %s137 = smul.addr %s136, 8
        %s138 = scalar_lea.vmem %s0, %s137
        %v139 = vld [vmem:[%s138] sm:$0xff]
        %v140 = vld [vmem:[%s1] sm:$0xf]
        %142 = vset.pattern.permute.xlu0 0
        %143 = vperm.xlu0 %142, %v139
        %v144 = vpop.permute.xlu0 %143
        %v146 = vperm.slane %v140, 0
        %v147 = vmul.f32 %v144, %v146
        %148 = vset.pattern.permute.xlu0 1
        %149 = vperm.xlu0 %148, %v139
        %v150 = vpop.permute.xlu0 %149
        %v152 = vperm.slane %v140, 1
        %v153 = vmul.f32 %v150, %v152
        %v154 = vadd.f32 %v147, %v153
        %155 = vadd.xlane.f32.xlu0 %v154
        %v156 = vpop.xlane.xlu0 %155
        %v157 = vrcp.pop 128.0
        %v158 = vmul.f32 128.0, %v157
        %v159 = vsub.f32 1.0, %v158
        %v160 = vmul.f32 %v157, %v159
        %v161 = vadd.f32 %v157, %v160
        %vm162 = vweird.f32 %v157
        %v163 = vsel %vm162, %v157, %v161
        %v164 = vmul.f32 %v156, %v163
        %v165 = vsub.f32 %v154, %v164
        %v166 = vmul.f32 %v165, %v165
        %167 = vadd.xlane.f32.xlu0 %v166
        %v168 = vpop.xlane.xlu0 %167
        %v169 = vmul.f32 %v168, %v163
        %v170 = vadd.f32 %v169, 1e-06
        %v171 = vrsqrt.pop %v170
        %v172 = vmul.f32 %v171, %v170
        %v173 = vmul.f32 %v172, %v171
        %v174 = vmul.f32 0.5, %v173
        %v175 = vsub.f32 1.5, %v174
        %v176 = vmul.f32 %v171, %v175
        %vm177 = vweird.f32 %v170
        %vm178 = vweird.f32 %v171
        %vm179 = vmor %vm177, %vm178
        %v180 = vsel %vm179, %v171, %v176
        %v181 = vmul.f32 %v165, %v180
        %v182 = vperm.slane %v140, 2
        %v183 = vmul.f32 %v181, %v182
        %v184 = vperm.slane %v140, 3
        %v185 = vadd.f32 %v183, %v184
        %186 = vst [vmem:[%s134] sm:$0xff] %v185
        %s187 = sand.u32 %s71, 1
        %s188 = scalar_lea.sflag [#allocation3], %s187
        %s189 = sand.u32 %s71, 1
        %s190 = smul.addr %s189, 8
        %s191 = scalar_lea.vmem [#allocation2], %s190
        // Predicated region
        $region29: #{_encoder_pallas_call.1} parent=27 // pred_check
          %p192 = pneg %p81
        $region30: #{_encoder_pallas_call.1} parent=27 // pred_check_branch
          %194 = sbr.rel (%p192) target = $region32
        $region31: #{_encoder_pallas_call.1} parent=27 // pred_region
          %196 = vsyncadd %s188, 0
          %s197 = smul.addr %s16, 8
          %s198 = scalar_lea.hbm %s2, %s197
          %s200 = sshll.u32 %s191, 4
          %s201 = int_to_ptr.vmem [resolvable:$true] %s200
          %s202 = sshll.u32 %s198, 4
          %s203 = int_to_ptr.hbm [resolvable:$true] %s202
          %205 = dma.vmem_to_hbm [thread:$0]  %s201, 128, %s203, %s188
        $region32: #{_encoder_pallas_call.1} parent=27 // pred_fallthru
          _
      $region28: #{_encoder_pallas_call.1} parent=5 // pred_fallthru
        _
      %p206 = scmp.le.s32.totalorder 2, %s11
      // Predicated region
      $region33: #{_encoder_pallas_call.1} parent=5 // pred_check
        %p207 = pneg %p206
      $region34: #{_encoder_pallas_call.1} parent=5 // pred_check_branch
        %209 = sbr.rel (%p207) target = $region36
      $region35: #{_encoder_pallas_call.1} parent=5 // pred_region
        %s210 = ssub.s32 %s11, 2
        // Predicated region
        $region37: #{_encoder_pallas_call.1} parent=35 // pred_check
          %p211 = pneg %p87
        $region38: #{_encoder_pallas_call.1} parent=35 // pred_check_branch
          %213 = sbr.rel (%p211) target = $region40
        $region39: #{_encoder_pallas_call.1} parent=35 // pred_region
          %s214 = sand.u32 %s72, 1
          %s215 = scalar_lea.sflag [#allocation3], %s214
          %s216 = sand.u32 %s72, 1
          %s217 = smul.addr %s216, 8
          %s218 = scalar_lea.vmem [#allocation2], %s217
          %220 = dma.done %s215, 128
        $region40: #{_encoder_pallas_call.1} parent=35 // pred_fallthru
          _
      $region36: #{_encoder_pallas_call.1} parent=5 // pred_fallthru
        _
    $region6: #{_encoder_pallas_call.1} parent=1 // loop_footer
      %s15 = sadd.s32 1, %s11
    $region7: #{_encoder_pallas_call.1} parent=1 // loop_footer_branch
      %10 = sbr.rel target = $region3
    $region8: #{_encoder_pallas_call.1} parent=1 // loop_exit
      _
    %221 = vsyncpa [#allocation3], 1
    %s222 = scalar_lea.sflag [#allocation3], 1
    %223 = vsyncpa %s222, 1

</llo_original>
